<compile_context>
chip_gen: v7x
topology: tpu7x:2x2x1
jax: 0.10.0
libtpu: 0.0.40
codegen_flags: <defaults>
</compile_context>

<pallas_src>
import functools

import jax
import jax.numpy as jnp
from jax.experimental import pallas as pl
from jax.experimental.pallas import tpu as pltpu

LANE = 128
SUBLANE = 8
P_SPLIT = 2            # max parallel spatial split (megacore)
TS_MAX = 512           # max sublanes per spatial tile
BLOCK_CAP = 2 << 20    # ~2 MiB score block cap (double-buffer safe everywhere)


def _dice_sums_kernel(score_ref, target_ref,            # inputs
                      int_ref, y_ref, z_ref,            # outputs = live accumulators
                      *, softmax):
    b = pl.program_id(1)          # batch index        (reduction axis)
    t = pl.program_id(2)          # spatial tile index (reduction axis, innermost)

    @pl.when(jnp.logical_and(b == 0, t == 0))
    def _():
        int_ref[...] = jnp.zeros_like(int_ref)
        y_ref[...] = jnp.zeros_like(y_ref)
        z_ref[...] = jnp.zeros_like(z_ref)

    _, C, TS, L = score_ref.shape
    G = TS // SUBLANE

    tgt = target_ref[0]                                  # (TS, L) int32
    tgt3 = tgt.reshape(G, SUBLANE, L)

    if softmax:
        # Fused softmax over the class axis (class axis fully inside the block).
        logits = [score_ref[0, c].astype(jnp.float32) for c in range(C)]
        m = logits[0]
        for c in range(1, C):
            m = jnp.maximum(m, logits[c])
        exps = [jnp.exp(x - m) for x in logits]
        denom = exps[0]
        for c in range(1, C):
            denom = denom + exps[c]
        valid = (tgt >= 0).astype(jnp.float32)           # zero out padded positions
        inv = valid / denom                              # one div per position, not per class
        scores = [e * inv for e in exps]
    else:
        scores = None

    for c in range(C):                                   # static, unrolled
        if softmax:
            sc = scores[c]                               # (TS, L) f32
        else:
            sc = score_ref[0, c].astype(jnp.float32)     # (TS, L)
        sc3 = sc.reshape(G, SUBLANE, L)
        oh = (tgt3 == c).astype(jnp.float32)             # one-hot slice
        # sums over the group axis are plain vreg adds (VPU), no XLU reductions
        int_ref[0, c] += jnp.sum(sc3 * oh, axis=0)       # (8, L)
        y_ref[0, c] += jnp.sum(oh, axis=0)
        z_ref[0, c] += jnp.sum(sc3 * sc3, axis=0)


@functools.partial(jax.jit, static_argnames=("n_classes", "softmax"))
def dice_loss(inputs, target, n_classes, weight=None, softmax=False):
    """Matches DiceLoss.forward(inputs, target, weight, softmax)."""
    B, C, H, W = inputs.shape
    assert C == n_classes, (inputs.shape, n_classes)
    n_sp = H * W

    itemsize = jnp.dtype(inputs.dtype).itemsize
    min_ts = SUBLANE * max(1, 4 // itemsize)             # keep packed dtypes tiled

    # Megacore split only if each split can get at least one minimum tile.
    s_rows_raw = -(-n_sp // LANE)
    p_split = P_SPLIT if s_rows_raw >= P_SPLIT * min_ts else 1

    # Pick the spatial tile: as big as possible, but
    #  (a) score block (C * ts * 128 * itemsize) stays <= ~2 MiB (double-buffer safe),
    #  (b) padding to a full (p_split, ts) chunk stays <= 12.5% of the input.
    ts = TS_MAX
    while ts > min_ts and C * ts * LANE * itemsize > BLOCK_CAP:
        ts //= 2
    while ts > min_ts:
        pad = (-n_sp) % (p_split * ts * LANE)
        if pad * 8 <= n_sp:
            break
        ts //= 2
    chunk = p_split * ts * LANE
    n_pad = n_sp + ((-n_sp) % chunk)
    s_rows = n_pad // LANE                               # sublane rows per batch elem
    nblk = s_rows // (p_split * ts)                      # spatial tiles per split

    # ---- layout plumbing: free reshapes of NCHW, no transpose, no upcast ----
    score = inputs.reshape(B, C, n_sp)
    tgt = target.reshape(B, n_sp).astype(jnp.int32)
    if n_pad != n_sp:
        score = jnp.pad(score, ((0, 0), (0, 0), (0, n_pad - n_sp)))
        tgt = jnp.pad(tgt, ((0, 0), (0, n_pad - n_sp)), constant_values=-1)
    score = score.reshape(B, C, s_rows, LANE)
    tgt = tgt.reshape(B, s_rows, LANE)

    part = jax.ShapeDtypeStruct((p_split, C, SUBLANE, LANE), jnp.float32)
    kernel = functools.partial(_dice_sums_kernel, softmax=softmax)

    pi, py, pz = pl.pallas_call(
        kernel,
        out_shape=(part, part, part),
        grid_spec=pltpu.PrefetchScalarGridSpec(
            num_scalar_prefetch=0,
            grid=(p_split, B, nblk),
            in_specs=[
                # score: all classes of one spatial tile
                pl.BlockSpec((1, C, ts, LANE),
                             lambda p, b, t: (b, 0, p * nblk + t, 0)),
                # target: read once per spatial tile (shared by all classes)
                pl.BlockSpec((1, ts, LANE),
                             lambda p, b, t: (b, p * nblk + t, 0)),
            ],
            out_specs=[
                pl.BlockSpec((1, C, SUBLANE, LANE), lambda p, b, t: (p, 0, 0, 0)),
                pl.BlockSpec((1, C, SUBLANE, LANE), lambda p, b, t: (p, 0, 0, 0)),
                pl.BlockSpec((1, C, SUBLANE, LANE), lambda p, b, t: (p, 0, 0, 0)),
            ],
        ),
        compiler_params=pltpu.CompilerParams(
            dimension_semantics=("parallel", "arbitrary", "arbitrary")),
    )(score, tgt)

    # ---- tiny per-class finalize (glue) ----
    intersect = jnp.sum(pi, axis=(0, 2, 3))              # (C,)
    y_sum = jnp.sum(py, axis=(0, 2, 3))
    z_sum = jnp.sum(pz, axis=(0, 2, 3))
    smooth = 1e-05
    dice = 1.0 - (2.0 * intersect + smooth) / (z_sum + y_sum + smooth)

    if weight is None:
        w = jnp.ones((n_classes,), jnp.float32)
    else:
        w = jnp.asarray(weight, jnp.float32)
    return jnp.sum(dice * w) / n_classes


def _dice_loss_ref(inputs, target, n_classes, weight=None, softmax=False):
    """Pure-JAX reference mirroring the PyTorch module."""
    if softmax:
        inputs = jax.nn.softmax(inputs, axis=1)
    onehot = (target[:, None, :, :] == jnp.arange(n_classes)[None, :, None, None])
    onehot = onehot.astype(jnp.float32)
    if weight is None:
        weight = [1.0] * n_classes
    smooth = 1e-05
    loss = 0.0
    for i in range(n_classes):
        s = inputs[:, i].astype(jnp.float32)
        t = onehot[:, i]
        intersect = jnp.sum(s * t)
        y_sum = jnp.sum(t * t)
        z_sum = jnp.sum(s * s)
        d = 1.0 - (2 * intersect + smooth) / (z_sum + y_sum + smooth)
        loss = loss + d * weight[i]
    return loss / n_classes


if __name__ == "__main__":
    n_classes = 4
    B, H, W = 2, 16, 16

    key = jax.random.PRNGKey(0)
    k1, k2 = jax.random.split(key)
    inputs = jax.random.uniform(k1, (B, n_classes, H, W), dtype=jnp.float32)
    target = jax.random.randint(k2, (B, H, W), 0, n_classes, dtype=jnp.int32)

    # softmax=False, unit weights
    out = dice_loss(inputs, target, n_classes, weight=None, softmax=False)
    out = jax.block_until_ready(out)
    ref = _dice_loss_ref(inputs, target, n_classes, weight=None, softmax=False)
    assert jnp.allclose(out, ref, rtol=1e-4, atol=1e-5), (out, ref)

    # softmax=True (fused in-kernel), class weights
    w = jnp.array([0.5, 1.0, 1.5, 2.0], jnp.float32)
    out_sm = dice_loss(inputs, target, n_classes, weight=w, softmax=True)
    out_sm = jax.block_until_ready(out_sm)
    ref_sm = _dice_loss_ref(inputs, target, n_classes, weight=w, softmax=True)
    assert jnp.allclose(out_sm, ref_sm, rtol=1e-4, atol=1e-5), (out_sm, ref_sm)

    print("KERNEL_OK")
</pallas_src>

<mosaic_0001>
module attributes {stable_mosaic.version = 11 : i64} {
  func.func @_dice_sums_kernel(%arg0: i32, %arg1: i32, %arg2: i32, %arg3: memref<1x4x8x128xf32, #tpu.memory_space<vmem>>, %arg4: memref<1x8x128xi32, #tpu.memory_space<vmem>>, %arg5: memref<1x4x8x128xf32, #tpu.memory_space<vmem>>, %arg6: memref<1x4x8x128xf32, #tpu.memory_space<vmem>>, %arg7: memref<1x4x8x128xf32, #tpu.memory_space<vmem>>) attributes {dimension_semantics = [#tpu.dimension_semantics<parallel>, #tpu.dimension_semantics<arbitrary>, #tpu.dimension_semantics<arbitrary>], iteration_bounds = array<i64: 1, 2, 1>, scalar_prefetch = 0 : i64, scratch_operands = 0 : i64, tpu.core_type = #tpu.core_type<tc>, window_params = [{transform_indices = @transform_0, window_bounds = array<i64: 1, 4, 8, 128>}, {transform_indices = @transform_1, window_bounds = array<i64: 1, 8, 128>}, {transform_indices = @transform_2, window_bounds = array<i64: 1, 4, 8, 128>}, {transform_indices = @transform_3, window_bounds = array<i64: 1, 4, 8, 128>}, {transform_indices = @transform_4, window_bounds = array<i64: 1, 4, 8, 128>}]} {
    %c0_i32 = arith.constant 0 : i32
    %0 = arith.cmpi eq, %arg1, %c0_i32 : i32
    %c0_i32_0 = arith.constant 0 : i32
    %1 = arith.cmpi eq, %arg2, %c0_i32_0 : i32
    %2 = arith.andi %0, %1 : i1
    %3 = arith.extui %2 : i1 to i32
    %c0_i32_1 = arith.constant 0 : i32
    %4 = arith.cmpi ne, %3, %c0_i32_1 : i32
    scf.if %4 {
      %cst_125 = arith.constant 0.000000e+00 : f32
      %128 = vector.broadcast %cst_125 : f32 to vector<1x4x8x128xf32>
      %c0_126 = arith.constant 0 : index
      %c0_127 = arith.constant 0 : index
      %c0_128 = arith.constant 0 : index
      %c0_129 = arith.constant 0 : index
      %129 = vector.load %arg5[%c0_126, %c0_127, %c0_128, %c0_129] : memref<1x4x8x128xf32, #tpu.memory_space<vmem>>, vector<1x4x8x128xf32>
      tpu.vector_store %arg5[%c0_126, %c0_127, %c0_128, %c0_129], %128 {strides = array<i32>} : memref<1x4x8x128xf32, #tpu.memory_space<vmem>>, vector<1x4x8x128xf32>,
      %cst_130 = arith.constant 0.000000e+00 : f32
      %130 = vector.broadcast %cst_130 : f32 to vector<1x4x8x128xf32>
      %c0_131 = arith.constant 0 : index
      %c0_132 = arith.constant 0 : index
      %c0_133 = arith.constant 0 : index
      %c0_134 = arith.constant 0 : index
      %131 = vector.load %arg6[%c0_131, %c0_132, %c0_133, %c0_134] : memref<1x4x8x128xf32, #tpu.memory_space<vmem>>, vector<1x4x8x128xf32>
      tpu.vector_store %arg6[%c0_131, %c0_132, %c0_133, %c0_134], %130 {strides = array<i32>} : memref<1x4x8x128xf32, #tpu.memory_space<vmem>>, vector<1x4x8x128xf32>,
      %cst_135 = arith.constant 0.000000e+00 : f32
      %132 = vector.broadcast %cst_135 : f32 to vector<1x4x8x128xf32>
      %c0_136 = arith.constant 0 : index
      %c0_137 = arith.constant 0 : index
      %c0_138 = arith.constant 0 : index
      %c0_139 = arith.constant 0 : index
      %133 = vector.load %arg7[%c0_136, %c0_137, %c0_138, %c0_139] : memref<1x4x8x128xf32, #tpu.memory_space<vmem>>, vector<1x4x8x128xf32>
      tpu.vector_store %arg7[%c0_136, %c0_137, %c0_138, %c0_139], %132 {strides = array<i32>} : memref<1x4x8x128xf32, #tpu.memory_space<vmem>>, vector<1x4x8x128xf32>,
    } else {
    }
    %c0 = arith.constant 0 : index
    %c0_2 = arith.constant 0 : index
    %c0_3 = arith.constant 0 : index
    %5 = vector.load %arg4[%c0, %c0_2, %c0_3] : memref<1x8x128xi32, #tpu.memory_space<vmem>>, vector<1x8x128xi32>
    %6 = vector.shape_cast %5 : vector<1x8x128xi32> to vector<8x128xi32>
    %7 = vector.shape_cast %6 : vector<8x128xi32> to vector<1x8x128xi32>
    %c0_4 = arith.constant 0 : index
    %c0_5 = arith.constant 0 : index
    %c0_6 = arith.constant 0 : index
    %c0_7 = arith.constant 0 : index
    %8 = vector.load %arg3[%c0_4, %c0_5, %c0_6, %c0_7] : memref<1x4x8x128xf32, #tpu.memory_space<vmem>>, vector<1x1x8x128xf32>
    %9 = vector.shape_cast %8 : vector<1x1x8x128xf32> to vector<8x128xf32>
    %10 = vector.shape_cast %9 : vector<8x128xf32> to vector<1x8x128xf32>
    %c0_i32_8 = arith.constant 0 : i32
    %11 = vector.broadcast %c0_i32_8 : i32 to vector<1x8x128xi32>
    %12 = arith.cmpi eq, %7, %11 : vector<1x8x128xi32>
    %13 = arith.extui %12 : vector<1x8x128xi1> to vector<1x8x128xi32>
    %14 = arith.sitofp %13 : vector<1x8x128xi32> to vector<1x8x128xf32>
    %c0_9 = arith.constant 0 : index
    %c0_10 = arith.constant 0 : index
    %c0_11 = arith.constant 0 : index
    %c0_12 = arith.constant 0 : index
    %15 = vector.load %arg5[%c0_9, %c0_10, %c0_11, %c0_12] : memref<1x4x8x128xf32, #tpu.memory_space<vmem>>, vector<1x1x8x128xf32>
    %16 = vector.shape_cast %15 : vector<1x1x8x128xf32> to vector<8x128xf32>
    %17 = arith.mulf %10, %14 : vector<1x8x128xf32>
    %cst = arith.constant dense<0.000000e+00> : vector<8x128xf32>
    %18 = vector.multi_reduction <add>, %17, %cst [0] : vector<1x8x128xf32> to vector<8x128xf32>
    %19 = arith.addf %16, %18 : vector<8x128xf32>
    %c0_13 = arith.constant 0 : index
    %c0_14 = arith.constant 0 : index
    %c0_15 = arith.constant 0 : index
    %c0_16 = arith.constant 0 : index
    %20 = vector.load %arg5[%c0_13, %c0_14, %c0_15, %c0_16] : memref<1x4x8x128xf32, #tpu.memory_space<vmem>>, vector<1x1x8x128xf32>
    %21 = vector.shape_cast %20 : vector<1x1x8x128xf32> to vector<8x128xf32>
    %22 = vector.shape_cast %19 : vector<8x128xf32> to vector<1x1x8x128xf32>
    tpu.vector_store %arg5[%c0_13, %c0_14, %c0_15, %c0_16], %22 {strides = array<i32>} : memref<1x4x8x128xf32, #tpu.memory_space<vmem>>, vector<1x1x8x128xf32>,
    %c0_17 = arith.constant 0 : index
    %c0_18 = arith.constant 0 : index
    %c0_19 = arith.constant 0 : index
    %c0_20 = arith.constant 0 : index
    %23 = vector.load %arg6[%c0_17, %c0_18, %c0_19, %c0_20] : memref<1x4x8x128xf32, #tpu.memory_space<vmem>>, vector<1x1x8x128xf32>
    %24 = vector.shape_cast %23 : vector<1x1x8x128xf32> to vector<8x128xf32>
    %cst_21 = arith.constant dense<0.000000e+00> : vector<8x128xf32>
    %25 = vector.multi_reduction <add>, %14, %cst_21 [0] : vector<1x8x128xf32> to vector<8x128xf32>
    %26 = arith.addf %24, %25 : vector<8x128xf32>
    %c0_22 = arith.constant 0 : index
    %c0_23 = arith.constant 0 : index
    %c0_24 = arith.constant 0 : index
    %c0_25 = arith.constant 0 : index
    %27 = vector.load %arg6[%c0_22, %c0_23, %c0_24, %c0_25] : memref<1x4x8x128xf32, #tpu.memory_space<vmem>>, vector<1x1x8x128xf32>
    %28 = vector.shape_cast %27 : vector<1x1x8x128xf32> to vector<8x128xf32>
    %29 = vector.shape_cast %26 : vector<8x128xf32> to vector<1x1x8x128xf32>
    tpu.vector_store %arg6[%c0_22, %c0_23, %c0_24, %c0_25], %29 {strides = array<i32>} : memref<1x4x8x128xf32, #tpu.memory_space<vmem>>, vector<1x1x8x128xf32>,
    %c0_26 = arith.constant 0 : index
    %c0_27 = arith.constant 0 : index
    %c0_28 = arith.constant 0 : index
    %c0_29 = arith.constant 0 : index
    %30 = vector.load %arg7[%c0_26, %c0_27, %c0_28, %c0_29] : memref<1x4x8x128xf32, #tpu.memory_space<vmem>>, vector<1x1x8x128xf32>
    %31 = vector.shape_cast %30 : vector<1x1x8x128xf32> to vector<8x128xf32>
    %32 = arith.mulf %10, %10 : vector<1x8x128xf32>
    %cst_30 = arith.constant dense<0.000000e+00> : vector<8x128xf32>
    %33 = vector.multi_reduction <add>, %32, %cst_30 [0] : vector<1x8x128xf32> to vector<8x128xf32>
    %34 = arith.addf %31, %33 : vector<8x128xf32>
    %c0_31 = arith.constant 0 : index
    %c0_32 = arith.constant 0 : index
    %c0_33 = arith.constant 0 : index
    %c0_34 = arith.constant 0 : index
    %35 = vector.load %arg7[%c0_31, %c0_32, %c0_33, %c0_34] : memref<1x4x8x128xf32, #tpu.memory_space<vmem>>, vector<1x1x8x128xf32>
    %36 = vector.shape_cast %35 : vector<1x1x8x128xf32> to vector<8x128xf32>
    %37 = vector.shape_cast %34 : vector<8x128xf32> to vector<1x1x8x128xf32>
    tpu.vector_store %arg7[%c0_31, %c0_32, %c0_33, %c0_34], %37 {strides = array<i32>} : memref<1x4x8x128xf32, #tpu.memory_space<vmem>>, vector<1x1x8x128xf32>,
    %c0_35 = arith.constant 0 : index
    %c1 = arith.constant 1 : index
    %c0_36 = arith.constant 0 : index
    %c0_37 = arith.constant 0 : index
    %38 = vector.load %arg3[%c0_35, %c1, %c0_36, %c0_37] : memref<1x4x8x128xf32, #tpu.memory_space<vmem>>, vector<1x1x8x128xf32>
    %39 = vector.shape_cast %38 : vector<1x1x8x128xf32> to vector<8x128xf32>
    %40 = vector.shape_cast %39 : vector<8x128xf32> to vector<1x8x128xf32>
    %c1_i32 = arith.constant 1 : i32
    %41 = vector.broadcast %c1_i32 : i32 to vector<1x8x128xi32>
    %42 = arith.cmpi eq, %7, %41 : vector<1x8x128xi32>
    %43 = arith.extui %42 : vector<1x8x128xi1> to vector<1x8x128xi32>
    %44 = arith.sitofp %43 : vector<1x8x128xi32> to vector<1x8x128xf32>
    %c0_38 = arith.constant 0 : index
    %c1_39 = arith.constant 1 : index
    %c0_40 = arith.constant 0 : index
    %c0_41 = arith.constant 0 : index
    %45 = vector.load %arg5[%c0_38, %c1_39, %c0_40, %c0_41] : memref<1x4x8x128xf32, #tpu.memory_space<vmem>>, vector<1x1x8x128xf32>
    %46 = vector.shape_cast %45 : vector<1x1x8x128xf32> to vector<8x128xf32>
    %47 = arith.mulf %40, %44 : vector<1x8x128xf32>
    %cst_42 = arith.constant dense<0.000000e+00> : vector<8x128xf32>
    %48 = vector.multi_reduction <add>, %47, %cst_42 [0] : vector<1x8x128xf32> to vector<8x128xf32>
    %49 = arith.addf %46, %48 : vector<8x128xf32>
    %c0_43 = arith.constant 0 : index
    %c1_44 = arith.constant 1 : index
    %c0_45 = arith.constant 0 : index
    %c0_46 = arith.constant 0 : index
    %50 = vector.load %arg5[%c0_43, %c1_44, %c0_45, %c0_46] : memref<1x4x8x128xf32, #tpu.memory_space<vmem>>, vector<1x1x8x128xf32>
    %51 = vector.shape_cast %50 : vector<1x1x8x128xf32> to vector<8x128xf32>
    %52 = vector.shape_cast %49 : vector<8x128xf32> to vector<1x1x8x128xf32>
    tpu.vector_store %arg5[%c0_43, %c1_44, %c0_45, %c0_46], %52 {strides = array<i32>} : memref<1x4x8x128xf32, #tpu.memory_space<vmem>>, vector<1x1x8x128xf32>,
    %c0_47 = arith.constant 0 : index
    %c1_48 = arith.constant 1 : index
    %c0_49 = arith.constant 0 : index
    %c0_50 = arith.constant 0 : index
    %53 = vector.load %arg6[%c0_47, %c1_48, %c0_49, %c0_50] : memref<1x4x8x128xf32, #tpu.memory_space<vmem>>, vector<1x1x8x128xf32>
    %54 = vector.shape_cast %53 : vector<1x1x8x128xf32> to vector<8x128xf32>
    %cst_51 = arith.constant dense<0.000000e+00> : vector<8x128xf32>
    %55 = vector.multi_reduction <add>, %44, %cst_51 [0] : vector<1x8x128xf32> to vector<8x128xf32>
    %56 = arith.addf %54, %55 : vector<8x128xf32>
    %c0_52 = arith.constant 0 : index
    %c1_53 = arith.constant 1 : index
    %c0_54 = arith.constant 0 : index
    %c0_55 = arith.constant 0 : index
    %57 = vector.load %arg6[%c0_52, %c1_53, %c0_54, %c0_55] : memref<1x4x8x128xf32, #tpu.memory_space<vmem>>, vector<1x1x8x128xf32>
    %58 = vector.shape_cast %57 : vector<1x1x8x128xf32> to vector<8x128xf32>
    %59 = vector.shape_cast %56 : vector<8x128xf32> to vector<1x1x8x128xf32>
    tpu.vector_store %arg6[%c0_52, %c1_53, %c0_54, %c0_55], %59 {strides = array<i32>} : memref<1x4x8x128xf32, #tpu.memory_space<vmem>>, vector<1x1x8x128xf32>,
    %c0_56 = arith.constant 0 : index
    %c1_57 = arith.constant 1 : index
    %c0_58 = arith.constant 0 : index
    %c0_59 = arith.constant 0 : index
    %60 = vector.load %arg7[%c0_56, %c1_57, %c0_58, %c0_59] : memref<1x4x8x128xf32, #tpu.memory_space<vmem>>, vector<1x1x8x128xf32>
    %61 = vector.shape_cast %60 : vector<1x1x8x128xf32> to vector<8x128xf32>
    %62 = arith.mulf %40, %40 : vector<1x8x128xf32>
    %cst_60 = arith.constant dense<0.000000e+00> : vector<8x128xf32>
    %63 = vector.multi_reduction <add>, %62, %cst_60 [0] : vector<1x8x128xf32> to vector<8x128xf32>
    %64 = arith.addf %61, %63 : vector<8x128xf32>
    %c0_61 = arith.constant 0 : index
    %c1_62 = arith.constant 1 : index
    %c0_63 = arith.constant 0 : index
    %c0_64 = arith.constant 0 : index
    %65 = vector.load %arg7[%c0_61, %c1_62, %c0_63, %c0_64] : memref<1x4x8x128xf32, #tpu.memory_space<vmem>>, vector<1x1x8x128xf32>
    %66 = vector.shape_cast %65 : vector<1x1x8x128xf32> to vector<8x128xf32>
    %67 = vector.shape_cast %64 : vector<8x128xf32> to vector<1x1x8x128xf32>
    tpu.vector_store %arg7[%c0_61, %c1_62, %c0_63, %c0_64], %67 {strides = array<i32>} : memref<1x4x8x128xf32, #tpu.memory_space<vmem>>, vector<1x1x8x128xf32>,
    %c0_65 = arith.constant 0 : index
    %c2 = arith.constant 2 : index
    %c0_66 = arith.constant 0 : index
    %c0_67 = arith.constant 0 : index
    %68 = vector.load %arg3[%c0_65, %c2, %c0_66, %c0_67] : memref<1x4x8x128xf32, #tpu.memory_space<vmem>>, vector<1x1x8x128xf32>
    %69 = vector.shape_cast %68 : vector<1x1x8x128xf32> to vector<8x128xf32>
    %70 = vector.shape_cast %69 : vector<8x128xf32> to vector<1x8x128xf32>
    %c2_i32 = arith.constant 2 : i32
    %71 = vector.broadcast %c2_i32 : i32 to vector<1x8x128xi32>
    %72 = arith.cmpi eq, %7, %71 : vector<1x8x128xi32>
    %73 = arith.extui %72 : vector<1x8x128xi1> to vector<1x8x128xi32>
    %74 = arith.sitofp %73 : vector<1x8x128xi32> to vector<1x8x128xf32>
    %c0_68 = arith.constant 0 : index
    %c2_69 = arith.constant 2 : index
    %c0_70 = arith.constant 0 : index
    %c0_71 = arith.constant 0 : index
    %75 = vector.load %arg5[%c0_68, %c2_69, %c0_70, %c0_71] : memref<1x4x8x128xf32, #tpu.memory_space<vmem>>, vector<1x1x8x128xf32>
    %76 = vector.shape_cast %75 : vector<1x1x8x128xf32> to vector<8x128xf32>
    %77 = arith.mulf %70, %74 : vector<1x8x128xf32>
    %cst_72 = arith.constant dense<0.000000e+00> : vector<8x128xf32>
    %78 = vector.multi_reduction <add>, %77, %cst_72 [0] : vector<1x8x128xf32> to vector<8x128xf32>
    %79 = arith.addf %76, %78 : vector<8x128xf32>
    %c0_73 = arith.constant 0 : index
    %c2_74 = arith.constant 2 : index
    %c0_75 = arith.constant 0 : index
    %c0_76 = arith.constant 0 : index
    %80 = vector.load %arg5[%c0_73, %c2_74, %c0_75, %c0_76] : memref<1x4x8x128xf32, #tpu.memory_space<vmem>>, vector<1x1x8x128xf32>
    %81 = vector.shape_cast %80 : vector<1x1x8x128xf32> to vector<8x128xf32>
    %82 = vector.shape_cast %79 : vector<8x128xf32> to vector<1x1x8x128xf32>
    tpu.vector_store %arg5[%c0_73, %c2_74, %c0_75, %c0_76], %82 {strides = array<i32>} : memref<1x4x8x128xf32, #tpu.memory_space<vmem>>, vector<1x1x8x128xf32>,
    %c0_77 = arith.constant 0 : index
    %c2_78 = arith.constant 2 : index
    %c0_79 = arith.constant 0 : index
    %c0_80 = arith.constant 0 : index
    %83 = vector.load %arg6[%c0_77, %c2_78, %c0_79, %c0_80] : memref<1x4x8x128xf32, #tpu.memory_space<vmem>>, vector<1x1x8x128xf32>
    %84 = vector.shape_cast %83 : vector<1x1x8x128xf32> to vector<8x128xf32>
    %cst_81 = arith.constant dense<0.000000e+00> : vector<8x128xf32>
    %85 = vector.multi_reduction <add>, %74, %cst_81 [0] : vector<1x8x128xf32> to vector<8x128xf32>
    %86 = arith.addf %84, %85 : vector<8x128xf32>
    %c0_82 = arith.constant 0 : index
    %c2_83 = arith.constant 2 : index
    %c0_84 = arith.constant 0 : index
    %c0_85 = arith.constant 0 : index
    %87 = vector.load %arg6[%c0_82, %c2_83, %c0_84, %c0_85] : memref<1x4x8x128xf32, #tpu.memory_space<vmem>>, vector<1x1x8x128xf32>
    %88 = vector.shape_cast %87 : vector<1x1x8x128xf32> to vector<8x128xf32>
    %89 = vector.shape_cast %86 : vector<8x128xf32> to vector<1x1x8x128xf32>
    tpu.vector_store %arg6[%c0_82, %c2_83, %c0_84, %c0_85], %89 {strides = array<i32>} : memref<1x4x8x128xf32, #tpu.memory_space<vmem>>, vector<1x1x8x128xf32>,
    %c0_86 = arith.constant 0 : index
    %c2_87 = arith.constant 2 : index
    %c0_88 = arith.constant 0 : index
    %c0_89 = arith.constant 0 : index
    %90 = vector.load %arg7[%c0_86, %c2_87, %c0_88, %c0_89] : memref<1x4x8x128xf32, #tpu.memory_space<vmem>>, vector<1x1x8x128xf32>
    %91 = vector.shape_cast %90 : vector<1x1x8x128xf32> to vector<8x128xf32>
    %92 = arith.mulf %70, %70 : vector<1x8x128xf32>
    %cst_90 = arith.constant dense<0.000000e+00> : vector<8x128xf32>
    %93 = vector.multi_reduction <add>, %92, %cst_90 [0] : vector<1x8x128xf32> to vector<8x128xf32>
    %94 = arith.addf %91, %93 : vector<8x128xf32>
    %c0_91 = arith.constant 0 : index
    %c2_92 = arith.constant 2 : index
    %c0_93 = arith.constant 0 : index
    %c0_94 = arith.constant 0 : index
    %95 = vector.load %arg7[%c0_91, %c2_92, %c0_93, %c0_94] : memref<1x4x8x128xf32, #tpu.memory_space<vmem>>, vector<1x1x8x128xf32>
    %96 = vector.shape_cast %95 : vector<1x1x8x128xf32> to vector<8x128xf32>
    %97 = vector.shape_cast %94 : vector<8x128xf32> to vector<1x1x8x128xf32>
    tpu.vector_store %arg7[%c0_91, %c2_92, %c0_93, %c0_94], %97 {strides = array<i32>} : memref<1x4x8x128xf32, #tpu.memory_space<vmem>>, vector<1x1x8x128xf32>,
    %c0_95 = arith.constant 0 : index
    %c3 = arith.constant 3 : index
    %c0_96 = arith.constant 0 : index
    %c0_97 = arith.constant 0 : index
    %98 = vector.load %arg3[%c0_95, %c3, %c0_96, %c0_97] : memref<1x4x8x128xf32, #tpu.memory_space<vmem>>, vector<1x1x8x128xf32>
    %99 = vector.shape_cast %98 : vector<1x1x8x128xf32> to vector<8x128xf32>
    %100 = vector.shape_cast %99 : vector<8x128xf32> to vector<1x8x128xf32>
    %c3_i32 = arith.constant 3 : i32
    %101 = vector.broadcast %c3_i32 : i32 to vector<1x8x128xi32>
    %102 = arith.cmpi eq, %7, %101 : vector<1x8x128xi32>
    %103 = arith.extui %102 : vector<1x8x128xi1> to vector<1x8x128xi32>
    %104 = arith.sitofp %103 : vector<1x8x128xi32> to vector<1x8x128xf32>
    %c0_98 = arith.constant 0 : index
    %c3_99 = arith.constant 3 : index
    %c0_100 = arith.constant 0 : index
    %c0_101 = arith.constant 0 : index
    %105 = vector.load %arg5[%c0_98, %c3_99, %c0_100, %c0_101] : memref<1x4x8x128xf32, #tpu.memory_space<vmem>>, vector<1x1x8x128xf32>
    %106 = vector.shape_cast %105 : vector<1x1x8x128xf32> to vector<8x128xf32>
    %107 = arith.mulf %100, %104 : vector<1x8x128xf32>
    %cst_102 = arith.constant dense<0.000000e+00> : vector<8x128xf32>
    %108 = vector.multi_reduction <add>, %107, %cst_102 [0] : vector<1x8x128xf32> to vector<8x128xf32>
    %109 = arith.addf %106, %108 : vector<8x128xf32>
    %c0_103 = arith.constant 0 : index
    %c3_104 = arith.constant 3 : index
    %c0_105 = arith.constant 0 : index
    %c0_106 = arith.constant 0 : index
    %110 = vector.load %arg5[%c0_103, %c3_104, %c0_105, %c0_106] : memref<1x4x8x128xf32, #tpu.memory_space<vmem>>, vector<1x1x8x128xf32>
    %111 = vector.shape_cast %110 : vector<1x1x8x128xf32> to vector<8x128xf32>
    %112 = vector.shape_cast %109 : vector<8x128xf32> to vector<1x1x8x128xf32>
    tpu.vector_store %arg5[%c0_103, %c3_104, %c0_105, %c0_106], %112 {strides = array<i32>} : memref<1x4x8x128xf32, #tpu.memory_space<vmem>>, vector<1x1x8x128xf32>,
    %c0_107 = arith.constant 0 : index
    %c3_108 = arith.constant 3 : index
    %c0_109 = arith.constant 0 : index
    %c0_110 = arith.constant 0 : index
    %113 = vector.load %arg6[%c0_107, %c3_108, %c0_109, %c0_110] : memref<1x4x8x128xf32, #tpu.memory_space<vmem>>, vector<1x1x8x128xf32>
    %114 = vector.shape_cast %113 : vector<1x1x8x128xf32> to vector<8x128xf32>
    %cst_111 = arith.constant dense<0.000000e+00> : vector<8x128xf32>
    %115 = vector.multi_reduction <add>, %104, %cst_111 [0] : vector<1x8x128xf32> to vector<8x128xf32>
    %116 = arith.addf %114, %115 : vector<8x128xf32>
    %c0_112 = arith.constant 0 : index
    %c3_113 = arith.constant 3 : index
    %c0_114 = arith.constant 0 : index
    %c0_115 = arith.constant 0 : index
    %117 = vector.load %arg6[%c0_112, %c3_113, %c0_114, %c0_115] : memref<1x4x8x128xf32, #tpu.memory_space<vmem>>, vector<1x1x8x128xf32>
    %118 = vector.shape_cast %117 : vector<1x1x8x128xf32> to vector<8x128xf32>
    %119 = vector.shape_cast %116 : vector<8x128xf32> to vector<1x1x8x128xf32>
    tpu.vector_store %arg6[%c0_112, %c3_113, %c0_114, %c0_115], %119 {strides = array<i32>} : memref<1x4x8x128xf32, #tpu.memory_space<vmem>>, vector<1x1x8x128xf32>,
    %c0_116 = arith.constant 0 : index
    %c3_117 = arith.constant 3 : index
    %c0_118 = arith.constant 0 : index
    %c0_119 = arith.constant 0 : index
    %120 = vector.load %arg7[%c0_116, %c3_117, %c0_118, %c0_119] : memref<1x4x8x128xf32, #tpu.memory_space<vmem>>, vector<1x1x8x128xf32>
    %121 = vector.shape_cast %120 : vector<1x1x8x128xf32> to vector<8x128xf32>
    %122 = arith.mulf %100, %100 : vector<1x8x128xf32>
    %cst_120 = arith.constant dense<0.000000e+00> : vector<8x128xf32>
    %123 = vector.multi_reduction <add>, %122, %cst_120 [0] : vector<1x8x128xf32> to vector<8x128xf32>
    %124 = arith.addf %121, %123 : vector<8x128xf32>
    %c0_121 = arith.constant 0 : index
    %c3_122 = arith.constant 3 : index
    %c0_123 = arith.constant 0 : index
    %c0_124 = arith.constant 0 : index
    %125 = vector.load %arg7[%c0_121, %c3_122, %c0_123, %c0_124] : memref<1x4x8x128xf32, #tpu.memory_space<vmem>>, vector<1x1x8x128xf32>
    %126 = vector.shape_cast %125 : vector<1x1x8x128xf32> to vector<8x128xf32>
    %127 = vector.shape_cast %124 : vector<8x128xf32> to vector<1x1x8x128xf32>
    tpu.vector_store %arg7[%c0_121, %c3_122, %c0_123, %c0_124], %127 {strides = array<i32>} : memref<1x4x8x128xf32, #tpu.memory_space<vmem>>, vector<1x1x8x128xf32>,
    return
  }
  func.func @transform_0(%arg0: i32, %arg1: i32, %arg2: i32) -> (i32, i32, i32, i32) {
    %c1_i32 = arith.constant 1 : i32
    %0 = arith.muli %arg0, %c1_i32 : i32
    %1 = arith.addi %0, %arg2 : i32
    %c0_i32 = arith.constant 0 : i32
    %c0_i32_0 = arith.constant 0 : i32
    %c0_i32_1 = arith.constant 0 : i32
    return %arg1, %c0_i32, %1, %c0_i32_0 : i32, i32, i32, i32
  }
  func.func @transform_1(%arg0: i32, %arg1: i32, %arg2: i32) -> (i32, i32, i32) {
    %c1_i32 = arith.constant 1 : i32
    %0 = arith.muli %arg0, %c1_i32 : i32
    %1 = arith.addi %0, %arg2 : i32
    %c0_i32 = arith.constant 0 : i32
    %c0_i32_0 = arith.constant 0 : i32
    return %arg1, %1, %c0_i32 : i32, i32, i32
  }
  func.func @transform_2(%arg0: i32, %arg1: i32, %arg2: i32) -> (i32, i32, i32, i32) {
    %c0_i32 = arith.constant 0 : i32
    %c0_i32_0 = arith.constant 0 : i32
    %c0_i32_1 = arith.constant 0 : i32
    %c0_i32_2 = arith.constant 0 : i32
    return %arg0, %c0_i32, %c0_i32_0, %c0_i32_1 : i32, i32, i32, i32
  }
  func.func @transform_3(%arg0: i32, %arg1: i32, %arg2: i32) -> (i32, i32, i32, i32) {
    %c0_i32 = arith.constant 0 : i32
    %c0_i32_0 = arith.constant 0 : i32
    %c0_i32_1 = arith.constant 0 : i32
    %c0_i32_2 = arith.constant 0 : i32
    return %arg0, %c0_i32, %c0_i32_0, %c0_i32_1 : i32, i32, i32, i32
  }
  func.func @transform_4(%arg0: i32, %arg1: i32, %arg2: i32) -> (i32, i32, i32, i32) {
    %c0_i32 = arith.constant 0 : i32
    %c0_i32_0 = arith.constant 0 : i32
    %c0_i32_1 = arith.constant 0 : i32
    %c0_i32_2 = arith.constant 0 : i32
    return %arg0, %c0_i32, %c0_i32_0, %c0_i32_1 : i32, i32, i32, i32
  }
}

</mosaic_0001>

<llo_original>
// kernel: dice_loss.1
$region0: #{dice_loss.1}
  #allocation0 [shape = 'u32[]', space=smem, size = 0x4, offset = 0x4, fixed_abs, tag = 'smem constant byte address 0x4 - core index']
  #allocation1 [shape = 'u32[144,128]{1,0:T(1,128)}', space=vmem, size = 0x12000, scoped, tag = 'internal scratch']
  %s0 = inlined_call_operand.vmem [shape: f32[2,4,8,128], index: 0, kind: input, shape index: {}]
  %s1 = inlined_call_operand.vmem [shape: s32[2,8,128], index: 1, kind: input, shape index: {}]
  %s2 = inlined_call_operand.vmem [shape: f32[1,4,8,128], index: 2, kind: output, shape index: {0}]
  %s3 = inlined_call_operand.vmem [shape: f32[1,4,8,128], index: 3, kind: output, shape index: {1}]
  %s4 = inlined_call_operand.vmem [shape: f32[1,4,8,128], index: 4, kind: output, shape index: {2}]
  %5 = xla_tuple %s2, %s3, %s4
  %s6 = sld [smem:[#allocation0]]
  $region61: #{dice_loss.1} parent=0
    _
  %s8 = ssub.s32 1, %s6
  %s9 = scalar_select 0, %s8, %s6
  loop: start=0, step=1, limit=4
  $region2: #{dice_loss.1} parent=0 // loop_pre_header
    _
  $region3: #{dice_loss.1} parent=0 // loop_header
    %s11 = sphi 0, %s15
    %p12 = scmp.ge.s32.totalorder %s11, 4
    %s18 = sphi 0, %s37
    %s19 = sphi 0, %s33
    %s20 = sphi 0, %s29
    %s21 = sphi 0, %s18
    %s22 = sphi 0, %s19
    %s23 = sphi 0, %s20
    %s24 = sphi 0, %s21
    %s25 = sphi 0, %s22
    %s26 = sphi 0, %s23
    %s44 = sphi 0, %s46
    %s47 = sphi 0, %s44
    %s48 = sphi 0, %s47
    %s64 = sphi 0, %s48
    %s74 = sphi 0, %s76
    %s77 = sphi 0, %s74
    %s78 = sphi 0, %s77
    %s94 = sphi 0, %s78
    %s100 = sphi 0, %s102
    %s103 = sphi 0, %s100
    %s104 = sphi 0, %s103
    %s120 = sphi 0, %s104
    %s126 = sphi 0, %s128
    %s129 = sphi 0, %s126
    %s130 = sphi 0, %s129
    %s146 = sphi 0, %s130
    %s152 = sphi 0, %s154
    %s155 = sphi 0, %s152
    %s156 = sphi 0, %s155
    %s172 = sphi 0, %s156
  $region4: #{dice_loss.1} parent=0 // loop_header_branch
    %14 = sbr.rel (%p12) target = $region8
  $region5: #{dice_loss.1} parent=0 // loop_body
    %s16 = ssub.s32 %s11, 1
    %s17 = ssub.s32 %s11, 2
    %s27 = sadd.s32 1, %s20
    %p28 = scmp.ge.s32.totalorder %s27, 1
    %s29 = scalar_select %p28, 0, %s27
    %s30 = sadd.s32 1, %s19
    %s31 = scalar_select %p28, %s30, %s19
    %p32 = scmp.ge.s32.totalorder %s31, 2
    %s33 = scalar_select %p32, 0, %s31
    %s34 = sadd.s32 1, %s18
    %s35 = scalar_select %p32, %s34, %s18
    %p36 = scmp.ge.s32.totalorder %s35, 1
    %s37 = scalar_select %p36, 0, %s35
    %s38 = sadd.s32 %s18, %s20
    %s39 = sadd.s32 %s37, %s29
    %s40 = ssub.s32 %s19, %s33
    %s41 = ssub.s32 %s38, %s39
    %s42 = sor.u32 %s40, %s41
    %p43 = scmp.eq.s32.totalorder %s42, 0
    %s45 = sadd.s32 %s44, 1
    %s46 = scalar_select %p43, %s44, %s45
    %p49 = pneg %p43
    %p50 = scmp.eq.s32.totalorder %s11, 1
    %p51 = por %p49, %p50
    %p52 = scmp.ne.s32.totalorder %s44, %s47
    %p53 = scmp.eq.s32.totalorder %s11, 0
    %p54 = por %p52, %p53
    %p55 = scmp.ne.s32.totalorder %s44, %s47
    %p56 = scmp.eq.s32.totalorder %s16, 1
    %p57 = por %p55, %p56
    %p58 = scmp.ne.s32.totalorder %s47, %s48
    %p59 = scmp.eq.s32.totalorder %s16, 0
    %p60 = por %p58, %p59
    %p61 = scmp.ne.s32.totalorder %s47, %s48
    %p62 = scmp.eq.s32.totalorder %s17, 1
    %p63 = por %p61, %p62
    %p65 = scmp.ne.s32.totalorder %s48, %s64
    %p66 = scmp.eq.s32.totalorder %s17, 0
    %p67 = por %p65, %p66
    %s68 = sadd.s32 %s18, %s20
    %s69 = sadd.s32 %s37, %s29
    %s70 = ssub.s32 %s19, %s33
    %s71 = ssub.s32 %s68, %s69
    %s72 = sor.u32 %s70, %s71
    %p73 = scmp.eq.s32.totalorder %s72, 0
    %s75 = sadd.s32 %s74, 1
    %s76 = scalar_select %p73, %s74, %s75
    %p79 = pneg %p73
    %p80 = scmp.eq.s32.totalorder %s11, 1
    %p81 = por %p79, %p80
    %p82 = scmp.ne.s32.totalorder %s74, %s77
    %p83 = scmp.eq.s32.totalorder %s11, 0
    %p84 = por %p82, %p83
    %p85 = scmp.ne.s32.totalorder %s74, %s77
    %p86 = scmp.eq.s32.totalorder %s16, 1
    %p87 = por %p85, %p86
    %p88 = scmp.ne.s32.totalorder %s77, %s78
    %p89 = scmp.eq.s32.totalorder %s16, 0
    %p90 = por %p88, %p89
    %p91 = scmp.ne.s32.totalorder %s77, %s78
    %p92 = scmp.eq.s32.totalorder %s17, 1
    %p93 = por %p91, %p92
    %p95 = scmp.ne.s32.totalorder %s78, %s94
    %p96 = scmp.eq.s32.totalorder %s17, 0
    %p97 = por %p95, %p96
    %s98 = ssub.s32 %s18, %s37
    %p99 = scmp.eq.s32.totalorder %s98, 0
    %s101 = sadd.s32 %s100, 1
    %s102 = scalar_select %p99, %s100, %s101
    %p105 = pneg %p99
    %p106 = scmp.eq.s32.totalorder %s11, 1
    %p107 = por %p105, %p106
    %p108 = scmp.ne.s32.totalorder %s100, %s103
    %p109 = scmp.eq.s32.totalorder %s11, 0
    %p110 = por %p108, %p109
    %p111 = scmp.ne.s32.totalorder %s100, %s103
    %p112 = scmp.eq.s32.totalorder %s16, 1
    %p113 = por %p111, %p112
    %p114 = scmp.ne.s32.totalorder %s103, %s104
    %p115 = scmp.eq.s32.totalorder %s16, 0
    %p116 = por %p114, %p115
    %p117 = scmp.ne.s32.totalorder %s103, %s104
    %p118 = scmp.eq.s32.totalorder %s17, 1
    %p119 = por %p117, %p118
    %p121 = scmp.ne.s32.totalorder %s104, %s120
    %p122 = scmp.eq.s32.totalorder %s17, 0
    %p123 = por %p121, %p122
    %s124 = ssub.s32 %s18, %s37
    %p125 = scmp.eq.s32.totalorder %s124, 0
    %s127 = sadd.s32 %s126, 1
    %s128 = scalar_select %p125, %s126, %s127
    %p131 = pneg %p125
    %p132 = scmp.eq.s32.totalorder %s11, 1
    %p133 = por %p131, %p132
    %p134 = scmp.ne.s32.totalorder %s126, %s129
    %p135 = scmp.eq.s32.totalorder %s11, 0
    %p136 = por %p134, %p135
    %p137 = scmp.ne.s32.totalorder %s126, %s129
    %p138 = scmp.eq.s32.totalorder %s16, 1
    %p139 = por %p137, %p138
    %p140 = scmp.ne.s32.totalorder %s129, %s130
    %p141 = scmp.eq.s32.totalorder %s16, 0
    %p142 = por %p140, %p141
    %p143 = scmp.ne.s32.totalorder %s129, %s130
    %p144 = scmp.eq.s32.totalorder %s17, 1
    %p145 = por %p143, %p144
    %p147 = scmp.ne.s32.totalorder %s130, %s146
    %p148 = scmp.eq.s32.totalorder %s17, 0
    %p149 = por %p147, %p148
    %s150 = ssub.s32 %s18, %s37
    %p151 = scmp.eq.s32.totalorder %s150, 0
    %s153 = sadd.s32 %s152, 1
    %s154 = scalar_select %p151, %s152, %s153
    %p157 = pneg %p151
    %p158 = scmp.eq.s32.totalorder %s11, 1
    %p159 = por %p157, %p158
    %p160 = scmp.ne.s32.totalorder %s152, %s155
    %p161 = scmp.eq.s32.totalorder %s11, 0
    %p162 = por %p160, %p161
    %p163 = scmp.ne.s32.totalorder %s152, %s155
    %p164 = scmp.eq.s32.totalorder %s16, 1
    %p165 = por %p163, %p164
    %p166 = scmp.ne.s32.totalorder %s155, %s156
    %p167 = scmp.eq.s32.totalorder %s16, 0
    %p168 = por %p166, %p167
    %p169 = scmp.ne.s32.totalorder %s155, %s156
    %p170 = scmp.eq.s32.totalorder %s17, 1
    %p171 = por %p169, %p170
    %p173 = scmp.ne.s32.totalorder %s156, %s172
    %p174 = scmp.eq.s32.totalorder %s17, 0
    %p175 = por %p173, %p174
    %p176 = scmp.le.s32.totalorder 1, %s11
    %p177 = scmp.lt.s32.totalorder %s11, 3
    %p178 = pnand %p176, %p177
    %p179 = pneg %p178
    // Predicated region
    $region9: #{dice_loss.1} parent=5 // pred_check
      _
    $region10: #{dice_loss.1} parent=5 // pred_check_branch
      %181 = sbr.rel (%p178) target = $region12
    $region11: #{dice_loss.1} parent=5 // pred_region
      %s182 = ssub.s32 %s11, 1
    $region12: #{dice_loss.1} parent=5 // pred_fallthru
      _
    %p183 = scmp.lt.s32.totalorder %s11, 2
    // Predicated region
    $region13: #{dice_loss.1} parent=5 // pred_check
      %p184 = pneg %p183
    $region14: #{dice_loss.1} parent=5 // pred_check_branch
      %186 = sbr.rel (%p184) target = $region16
    $region15: #{dice_loss.1} parent=5 // pred_region
      // Predicated region
      $region17: #{dice_loss.1} parent=15 // pred_check
        %p187 = pneg %p54
      $region18: #{dice_loss.1} parent=15 // pred_check_branch
        %189 = sbr.rel (%p187) target = $region20
      $region19: #{dice_loss.1} parent=15 // pred_region
        %s190 = sadd.s32 %s18, %s20
        %p191 = scmp.lt.s32.totalorder %s19, 1
        %s192 = scalar_select %p191, %s19, 1
        %p193 = scmp.lt.s32.totalorder %s190, 0
        %s194 = scalar_select %p193, %s190, 0
        %s195 = smul.addr %s192, 4
        %s196 = sadd.s32 %s194, %s195
        %s197 = smul.addr %s196, 8
        %s198 = scalar_lea.vmem %s0, %s197
        %s199 = sadd.s32 %s18, %s20
      $region20: #{dice_loss.1} parent=15 // pred_fallthru
        _
      // Predicated region
      $region21: #{dice_loss.1} parent=15 // pred_check
        %p200 = pneg %p84
      $region22: #{dice_loss.1} parent=15 // pred_check_branch
        %202 = sbr.rel (%p200) target = $region24
      $region23: #{dice_loss.1} parent=15 // pred_region
        %s203 = sadd.s32 %s18, %s20
        %p204 = scmp.lt.s32.totalorder %s19, 1
        %s205 = scalar_select %p204, %s19, 1
        %p206 = scmp.lt.s32.totalorder %s203, 0
        %s207 = scalar_select %p206, %s203, 0
        %s208 = sadd.s32 %s207, %s205
        %s209 = smul.addr %s208, 8
        %s210 = scalar_lea.vmem %s1, %s209
        %s211 = sadd.s32 %s18, %s20
      $region24: #{dice_loss.1} parent=15 // pred_fallthru
        _
    $region16: #{dice_loss.1} parent=5 // pred_fallthru
      _
    %p212 = scmp.le.s32.totalorder 1, %s11
    %p213 = scmp.lt.s32.totalorder %s11, 3
    %p214 = pnand %p212, %p213
    %p215 = pneg %p214
    // Predicated region
    $region25: #{dice_loss.1} parent=5 // pred_check
      _
    $region26: #{dice_loss.1} parent=5 // pred_check_branch
      %217 = sbr.rel (%p214) target = $region28
    $region27: #{dice_loss.1} parent=5 // pred_region
      %s218 = ssub.s32 %s11, 1
      %s219 = sadd.s32 %s21, %s23
      %p220 = scmp.lt.s32.totalorder %s22, 1
      %s221 = scalar_select %p220, %s22, 1
      %p222 = scmp.lt.s32.totalorder %s219, 0
      %s223 = scalar_select %p222, %s219, 0
      %s224 = smul.addr %s221, 4
      %s225 = sadd.s32 %s223, %s224
      %s226 = smul.addr %s225, 8
      %s227 = scalar_lea.vmem %s0, %s226
      %p228 = pneg %p60
      %p229 = pneg %p57
      %s230 = sadd.s32 %s21, %s23
      %p231 = scmp.lt.s32.totalorder %s22, 1
      %s232 = scalar_select %p231, %s22, 1
      %p233 = scmp.lt.s32.totalorder %s230, 0
      %s234 = scalar_select %p233, %s230, 0
      %s235 = sadd.s32 %s234, %s232
      %s236 = smul.addr %s235, 8
      %s237 = scalar_lea.vmem %s1, %s236
      %p238 = pneg %p90
      %p239 = pneg %p87
      %p240 = pneg %p116
      %p241 = pneg %p113
      %p242 = scmp.lt.s32.totalorder %s21, 0
      %s243 = scalar_select %p242, %s21, 0
      %s244 = smul.addr %s243, 4
      %s245 = smul.addr %s244, 8
      %s246 = scalar_lea.vmem %s2, %s245
      %p247 = pneg %p142
      %p248 = pneg %p139
      %p249 = scmp.lt.s32.totalorder %s21, 0
      %s250 = scalar_select %p249, %s21, 0
      %s251 = smul.addr %s250, 4
      %s252 = smul.addr %s251, 8
      %s253 = scalar_lea.vmem %s3, %s252
      %p254 = pneg %p168
      %p255 = pneg %p165
      %p256 = scmp.lt.s32.totalorder %s21, 0
      %s257 = scalar_select %p256, %s21, 0
      %s258 = smul.addr %s257, 4
      %s259 = smul.addr %s258, 8
      %s260 = scalar_lea.vmem %s4, %s259
      %s261 = sadd.s32 %s21, %s23
      %p262 = scmp.lt.s32.totalorder %s22, 1
      %s263 = scalar_select %p262, %s22, 1
      %p264 = scmp.lt.s32.totalorder %s261, 0
      %s265 = scalar_select %p264, %s261, 0
      %s266 = smul.addr %s263, 4
      %s267 = sadd.s32 %s265, %s266
      %s268 = smul.addr %s267, 8
      %s269 = scalar_lea.vmem %s0, %s268
      %s270 = sadd.s32 %s21, %s23
      %s271 = sadd.s32 %s21, %s23
      %p272 = scmp.lt.s32.totalorder %s22, 1
      %s273 = scalar_select %p272, %s22, 1
      %p274 = scmp.lt.s32.totalorder %s271, 0
      %s275 = scalar_select %p274, %s271, 0
      %s276 = sadd.s32 %s275, %s273
      %s277 = smul.addr %s276, 8
      %s278 = scalar_lea.vmem %s1, %s277
      %s279 = sadd.s32 %s21, %s23
      %p280 = scmp.lt.s32.totalorder %s21, 0
      %s281 = scalar_select %p280, %s21, 0
      %s282 = smul.addr %s281, 4
      %s283 = smul.addr %s282, 8
      %s284 = scalar_lea.vmem %s2, %s283
      %p285 = scmp.lt.s32.totalorder %s21, 0
      %s286 = scalar_select %p285, %s21, 0
      %s287 = smul.addr %s286, 4
      %s288 = smul.addr %s287, 8
      %s289 = scalar_lea.vmem %s3, %s288
      %p290 = scmp.lt.s32.totalorder %s21, 0
      %s291 = scalar_select %p290, %s21, 0
      %s292 = smul.addr %s291, 4
      %s293 = smul.addr %s292, 8
      %s294 = scalar_lea.vmem %s4, %s293
      %p295 = scmp.eq.s32.totalorder %s22, 0
      %p296 = scmp.eq.s32.totalorder %s23, 0
      %p297 = pnand %p295, %p296
      %p298 = pneg %p297
      // Predicated region
      $region29: #{dice_loss.1} parent=27 // pred_check
        _
      $region30: #{dice_loss.1} parent=27 // pred_check_branch
        %300 = sbr.rel (%p297) target = $region32
      $region31: #{dice_loss.1} parent=27 // pred_region
        %301 = vst [vmem:[%s284] sm:$0xff] 0.0
        %302 = vst [vmem:[%s284 + $0x8] sm:$0xff] 0.0
        %303 = vst [vmem:[%s284 + $0x10] sm:$0xff] 0.0
        %304 = vst [vmem:[%s284 + $0x18] sm:$0xff] 0.0
        %305 = vst [vmem:[%s289] sm:$0xff] 0.0
        %306 = vst [vmem:[%s289 + $0x8] sm:$0xff] 0.0
        %307 = vst [vmem:[%s289 + $0x10] sm:$0xff] 0.0
        %308 = vst [vmem:[%s289 + $0x18] sm:$0xff] 0.0
        %309 = vst [vmem:[%s294] sm:$0xff] 0.0
        %310 = vst [vmem:[%s294 + $0x8] sm:$0xff] 0.0
        %311 = vst [vmem:[%s294 + $0x10] sm:$0xff] 0.0
        %312 = vst [vmem:[%s294 + $0x18] sm:$0xff] 0.0
      $region32: #{dice_loss.1} parent=27 // pred_fallthru
        _
      %v313 = vld [vmem:[%s278] sm:$0xff]
      %v314 = vld [vmem:[%s269] sm:$0xff]
      %vm315 = vcmp.eq.s32.totalorder %v313, 0
      %v316 = vsel %vm315, 1, 0
      %v317 = vcvt.s32.f32 %v316
      %v318 = vld [vmem:[%s284] sm:$0xff]
      %v319 = vmul.f32 %v314, %v317
      %v320 = vadd.f32 %v319, 0.0
      %v321 = vadd.f32 %v318, %v320
      %322 = vst [vmem:[%s284] sm:$0xff] %v321
      %v323 = vld [vmem:[%s289] sm:$0xff]
      %v324 = vadd.f32 %v317, 0.0
      %v325 = vadd.f32 %v323, %v324
      %326 = vst [vmem:[%s289] sm:$0xff] %v325
      %v327 = vld [vmem:[%s294] sm:$0xff]
      %v328 = vmul.f32 %v314, %v314
      %v329 = vadd.f32 %v328, 0.0
      %v330 = vadd.f32 %v327, %v329
      %331 = vst [vmem:[%s294] sm:$0xff] %v330
      %s332 = scalar_lea.vmem %s269, 8
      %v333 = vld [vmem:[%s332] sm:$0xff]
      %vm334 = vcmp.eq.s32.totalorder %v313, 1
      %v335 = vsel %vm334, 1, 0
      %v336 = vcvt.s32.f32 %v335
      %s337 = scalar_lea.vmem %s284, 8
      %v338 = vld [vmem:[%s337] sm:$0xff]
      %v339 = vmul.f32 %v333, %v336
      %v340 = vadd.f32 %v339, 0.0
      %v341 = vadd.f32 %v338, %v340
      %342 = vst [vmem:[%s337] sm:$0xff] %v341
      %s343 = scalar_lea.vmem %s289, 8
      %v344 = vld [vmem:[%s343] sm:$0xff]
      %v345 = vadd.f32 %v336, 0.0
      %v346 = vadd.f32 %v344, %v345
      %347 = vst [vmem:[%s343] sm:$0xff] %v346
      %s348 = scalar_lea.vmem %s294, 8
      %v349 = vld [vmem:[%s348] sm:$0xff]
      %v350 = vmul.f32 %v333, %v333
      %v351 = vadd.f32 %v350, 0.0
      %v352 = vadd.f32 %v349, %v351
      %353 = vst [vmem:[%s348] sm:$0xff] %v352
      %s354 = scalar_lea.vmem %s269, 16
      %v355 = vld [vmem:[%s354] sm:$0xff]
      %vm356 = vcmp.eq.s32.totalorder %v313, 2
      %v357 = vsel %vm356, 1, 0
      %v358 = vcvt.s32.f32 %v357
      %s359 = scalar_lea.vmem %s284, 16
      %v360 = vld [vmem:[%s359] sm:$0xff]
      %v361 = vmul.f32 %v355, %v358
      %v362 = vadd.f32 %v361, 0.0
      %v363 = vadd.f32 %v360, %v362
      %364 = vst [vmem:[%s359] sm:$0xff] %v363
      %s365 = scalar_lea.vmem %s289, 16
      %v366 = vld [vmem:[%s365] sm:$0xff]
      %v367 = vadd.f32 %v358, 0.0
      %v368 = vadd.f32 %v366, %v367
      %369 = vst [vmem:[%s365] sm:$0xff] %v368
      %s370 = scalar_lea.vmem %s294, 16
      %v371 = vld [vmem:[%s370] sm:$0xff]
      %v372 = vmul.f32 %v355, %v355
      %v373 = vadd.f32 %v372, 0.0
      %v374 = vadd.f32 %v371, %v373
      %375 = vst [vmem:[%s370] sm:$0xff] %v374
      %s376 = scalar_lea.vmem %s269, 24
      %v377 = vld [vmem:[%s376] sm:$0xff]
      %vm378 = vcmp.eq.s32.totalorder %v313, 3
      %v379 = vsel %vm378, 1, 0
      %v380 = vcvt.s32.f32 %v379
      %s381 = scalar_lea.vmem %s284, 24
      %v382 = vld [vmem:[%s381] sm:$0xff]
      %v383 = vmul.f32 %v377, %v380
      %v384 = vadd.f32 %v383, 0.0
      %v385 = vadd.f32 %v382, %v384
      %386 = vst [vmem:[%s381] sm:$0xff] %v385
      %s387 = scalar_lea.vmem %s289, 24
      %v388 = vld [vmem:[%s387] sm:$0xff]
      %v389 = vadd.f32 %v380, 0.0
      %v390 = vadd.f32 %v388, %v389
      %391 = vst [vmem:[%s387] sm:$0xff] %v390
      %s392 = scalar_lea.vmem %s294, 24
      %v393 = vld [vmem:[%s392] sm:$0xff]
      %v394 = vmul.f32 %v377, %v377
      %v395 = vadd.f32 %v394, 0.0
      %v396 = vadd.f32 %v393, %v395
      %397 = vst [vmem:[%s392] sm:$0xff] %v396
      %p398 = scmp.lt.s32.totalorder %s21, 0
      %s399 = scalar_select %p398, %s21, 0
      %s400 = smul.addr %s399, 4
      %s401 = smul.addr %s400, 8
      %s402 = scalar_lea.vmem %s2, %s401
      %p403 = scmp.lt.s32.totalorder %s21, 0
      %s404 = scalar_select %p403, %s21, 0
      %s405 = smul.addr %s404, 4
      %s406 = smul.addr %s405, 8
      %s407 = scalar_lea.vmem %s3, %s406
      %p408 = scmp.lt.s32.totalorder %s21, 0
      %s409 = scalar_select %p408, %s21, 0
      %s410 = smul.addr %s409, 4
      %s411 = smul.addr %s410, 8
      %s412 = scalar_lea.vmem %s4, %s411
      // Predicated region
      $region33: #{dice_loss.1} parent=27 // pred_check
        %p413 = pneg %p113
      $region34: #{dice_loss.1} parent=27 // pred_check_branch
        %415 = sbr.rel (%p413) target = $region36
      $region35: #{dice_loss.1} parent=27 // pred_region
        _
      $region36: #{dice_loss.1} parent=27 // pred_fallthru
        _
      // Predicated region
      $region37: #{dice_loss.1} parent=27 // pred_check
        %p416 = pneg %p139
      $region38: #{dice_loss.1} parent=27 // pred_check_branch
        %418 = sbr.rel (%p416) target = $region40
      $region39: #{dice_loss.1} parent=27 // pred_region
        _
      $region40: #{dice_loss.1} parent=27 // pred_fallthru
        _
      // Predicated region
      $region41: #{dice_loss.1} parent=27 // pred_check
        %p419 = pneg %p165
      $region42: #{dice_loss.1} parent=27 // pred_check_branch
        %421 = sbr.rel (%p419) target = $region44
      $region43: #{dice_loss.1} parent=27 // pred_region
        _
      $region44: #{dice_loss.1} parent=27 // pred_fallthru
        _
      // Predicated region
      $region45: #{dice_loss.1} parent=27 // pred_check
        %p422 = pneg %p113
      $region46: #{dice_loss.1} parent=27 // pred_check_branch
        %424 = sbr.rel (%p422) target = $region48
      $region47: #{dice_loss.1} parent=27 // pred_region
        %p425 = scmp.lt.s32.totalorder %s21, 0
        %s426 = scalar_select %p425, %s21, 0
        %s427 = smul.addr %s426, 4
        %s428 = smul.addr %s427, 8
        %s429 = scalar_lea.vmem %s2, %s428
      $region48: #{dice_loss.1} parent=27 // pred_fallthru
        _
      // Predicated region
      $region49: #{dice_loss.1} parent=27 // pred_check
        %p430 = pneg %p139
      $region50: #{dice_loss.1} parent=27 // pred_check_branch
        %432 = sbr.rel (%p430) target = $region52
      $region51: #{dice_loss.1} parent=27 // pred_region
        %p433 = scmp.lt.s32.totalorder %s21, 0
        %s434 = scalar_select %p433, %s21, 0
        %s435 = smul.addr %s434, 4
        %s436 = smul.addr %s435, 8
        %s437 = scalar_lea.vmem %s3, %s436
      $region52: #{dice_loss.1} parent=27 // pred_fallthru
        _
      // Predicated region
      $region53: #{dice_loss.1} parent=27 // pred_check
        %p438 = pneg %p165
      $region54: #{dice_loss.1} parent=27 // pred_check_branch
        %440 = sbr.rel (%p438) target = $region56
      $region55: #{dice_loss.1} parent=27 // pred_region
        %p441 = scmp.lt.s32.totalorder %s21, 0
        %s442 = scalar_select %p441, %s21, 0
        %s443 = smul.addr %s442, 4
        %s444 = smul.addr %s443, 8
        %s445 = scalar_lea.vmem %s4, %s444
      $region56: #{dice_loss.1} parent=27 // pred_fallthru
        _
    $region28: #{dice_loss.1} parent=5 // pred_fallthru
      _
    %p446 = scmp.le.s32.totalorder 2, %s11
    // Predicated region
    $region57: #{dice_loss.1} parent=5 // pred_check
      %p447 = pneg %p446
    $region58: #{dice_loss.1} parent=5 // pred_check_branch
      %449 = sbr.rel (%p447) target = $region60
    $region59: #{dice_loss.1} parent=5 // pred_region
      %s450 = ssub.s32 %s11, 2
    $region60: #{dice_loss.1} parent=5 // pred_fallthru
      _
  $region6: #{dice_loss.1} parent=0 // loop_footer
    %s15 = sadd.s32 1, %s11
  $region7: #{dice_loss.1} parent=0 // loop_footer_branch
    %10 = sbr.rel target = $region3
  $region8: #{dice_loss.1} parent=0 // loop_exit
    _

</llo_original>
